<compile_context>
chip_gen: v5e
topology: v5e:2x2
jax: 0.10.0
libtpu: 0.0.40
codegen_flags: <defaults>
</compile_context>

<pallas_src>
import functools

import jax
import jax.numpy as jnp
from jax import lax
from jax.experimental import pallas as pl
from jax.experimental.pallas import tpu as pltpu


_TILE_M_MAX = 4096       # row tile ceiling (bf16/f32 tiles of <=64 lanes stay well under VMEM)
_MIN_GRID_STEPS = 4      # keep >=4 grid steps at large M so both v7x TensorCores stay busy
_DN_NT = (((1,), (1,)), ((), ()))  # contract last dims:  a @ b.T  (no b.T materialized)
_DN_TN = (((0,), (0,)), ((), ()))  # contract first dims: a.T @ b  (no a.T materialized)


def _round_up(x, m):
    return ((x + m - 1) // m) * m


def _pick_tile_rows(m):
    tm = -(-m // _MIN_GRID_STEPS)                 # cdiv
    tm = _round_up(max(tm, 16), 16)               # 16-row multiple: safe for bf16 packing
    return min(tm, _TILE_M_MAX, _round_up(m, 16))


# In-kernel silu / dsilu (f32; reciprocal on the EUP slot).
def _silu(z):
    s = pl.reciprocal(1.0 + jnp.exp(-z), approx=True)
    return z * s


def _dsilu(z):
    s = pl.reciprocal(1.0 + jnp.exp(-z), approx=True)
    return s * (1.0 + z * (1.0 - s))


# Plain-JAX versions (used only on the weight-grad paths, which are dead for forces).
def _silu_jnp(z):
    s = jax.nn.sigmoid(z)
    return z * s


def _dsilu_jnp(z):
    s = jax.nn.sigmoid(z)
    return s * (1.0 + z * (1.0 - s))


def _row_pallas(kernel, row_inputs, full_inputs, outs):
    """Row-tiled pallas_call. row_inputs tiled over rows, full_inputs replicated per tile.

    outs: list of (ncols, dtype) for the outputs (each [M, ncols], row-tiled like inputs).
    """
    m = row_inputs[0].shape[0]
    tm = _pick_tile_rows(m)
    grid = (pl.cdiv(m, tm),)
    in_specs = [pl.BlockSpec((tm, x.shape[1]), lambda i: (i, 0)) for x in row_inputs]
    in_specs += [pl.BlockSpec(x.shape, lambda i: (0, 0)) for x in full_inputs]
    out_specs = tuple(pl.BlockSpec((tm, d), lambda i: (i, 0)) for d, _ in outs)
    out_shape = tuple(jax.ShapeDtypeStruct((m, d), dt) for d, dt in outs)
    if len(outs) == 1:
        out_specs, out_shape = out_specs[0], out_shape[0]
    return pl.pallas_call(
        kernel,
        grid=grid,
        in_specs=in_specs,
        out_specs=out_specs,
        out_shape=out_shape,
        compiler_params=pltpu.CompilerParams(dimension_semantics=("parallel",)),
    )(*row_inputs, *full_inputs)


# ----------------------------------------------------------------------------
# 1) Atom-embedding linear:  h = x @ W + b   (bf16 MXU feed, f32 accumulate)
# ----------------------------------------------------------------------------
def _linear_fwd_kernel(x_ref, w_ref, b_ref, o_ref):
    x = x_ref[...].astype(jnp.bfloat16)
    w = w_ref[...].astype(jnp.bfloat16)
    o_ref[...] = jnp.dot(x, w, preferred_element_type=jnp.float32) + b_ref[...]


def _linear_impl(x, w, b):
    return _row_pallas(_linear_fwd_kernel, [x], [w, b.reshape(1, -1)],
                       [(w.shape[1], jnp.float32)])


@jax.custom_vjp
def linear_layer(x, w, b):
    return _linear_impl(x, w, b)


def _linear_fwd_rule(x, w, b):
    return _linear_impl(x, w, b), (x, w)


def _linear_bwd_rule(res, g):
    # x_attr is independent of pos -> this whole bwd is dead for forces (DCE'd).
    x, w = res
    dx = lax.dot_general(g, w, _DN_NT)
    dw = lax.dot_general(x, g, _DN_TN)
    db = jnp.sum(g, axis=0)
    return dx, dw, db


linear_layer.defvjp(_linear_fwd_rule, _linear_bwd_rule)


# ----------------------------------------------------------------------------
# 2) Fused MLP+silu:  out = silu(x @ W + b)
#    Used for both the message ([E, 59] concat) and the update-core ([N, 64] concat).
#    No pre-activation z is written to HBM; bwd recomputes z from (x, W, b).
# ----------------------------------------------------------------------------
def _mlp_silu_fwd_kernel(x_ref, w_ref, b_ref, o_ref):
    w = w_ref[...].astype(jnp.bfloat16)
    z = jnp.dot(x_ref[...], w, preferred_element_type=jnp.float32) + b_ref[...]
    o_ref[...] = _silu(z)


def _mlp_silu_bwd_kernel(g_ref, x_ref, w_ref, b_ref, dx_ref):
    w = w_ref[...].astype(jnp.bfloat16)
    x = x_ref[...]
    z = jnp.dot(x, w, preferred_element_type=jnp.float32) + b_ref[...]      # recompute z
    dz = g_ref[...] * _dsilu(z)
    dx = lax.dot_general(dz.astype(jnp.bfloat16), w, _DN_NT,
                         preferred_element_type=jnp.float32)
    dx_ref[...] = dx.astype(dx_ref.dtype)


def _mlp_silu_impl(x, w, b):
    return _row_pallas(_mlp_silu_fwd_kernel, [x], [w, b.reshape(1, -1)],
                       [(w.shape[1], jnp.float32)])


@jax.custom_vjp
def mlp_silu(x, w, b):
    return _mlp_silu_impl(x, w, b)


def _mlp_silu_fwd_rule(x, w, b):
    return _mlp_silu_impl(x, w, b), (x, w, b)


def _mlp_silu_bwd_rule(res, g):
    x, w, b = res
    dx = _row_pallas(_mlp_silu_bwd_kernel, [g, x], [w, b.reshape(1, -1)],
                     [(x.shape[1], x.dtype)])
    # Weight/bias grads in plain JAX: dead code for forces -> DCE'd under jit.
    xf = x.astype(jnp.float32)
    z = xf @ w + b
    dz = g * _dsilu_jnp(z)
    dw = lax.dot_general(xf, dz, _DN_TN)
    db = jnp.sum(dz, axis=0)
    return dx, dw, db


mlp_silu.defvjp(_mlp_silu_fwd_rule, _mlp_silu_bwd_rule)


# ----------------------------------------------------------------------------
# 3) Fused post_conv head:  out = silu(x@W0 + b0) @ W1 + b1
#    Intermediate activation stays in VMEM; bwd recomputes z0.
# ----------------------------------------------------------------------------
def _head_fwd_kernel(x_ref, w0_ref, b0_ref, w1_ref, b1_ref, o_ref):
    w0 = w0_ref[...].astype(jnp.bfloat16)
    w1 = w1_ref[...].astype(jnp.bfloat16)
    z0 = jnp.dot(x_ref[...], w0, preferred_element_type=jnp.float32) + b0_ref[...]
    a0 = _silu(z0).astype(jnp.bfloat16)           # [TILE_M, hidden//2] never leaves VMEM
    o_ref[...] = jnp.dot(a0, w1, preferred_element_type=jnp.float32) + b1_ref[...]


def _head_bwd_kernel(g_ref, x_ref, w0_ref, b0_ref, w1_ref, dx_ref):
    w0 = w0_ref[...].astype(jnp.bfloat16)
    w1 = w1_ref[...].astype(jnp.bfloat16)
    z0 = jnp.dot(x_ref[...], w0, preferred_element_type=jnp.float32) + b0_ref[...]
    da0 = lax.dot_general(g_ref[...].astype(jnp.bfloat16), w1, _DN_NT,
                          preferred_element_type=jnp.float32)
    dz0 = da0 * _dsilu(z0)
    dx = lax.dot_general(dz0.astype(jnp.bfloat16), w0, _DN_NT,
                         preferred_element_type=jnp.float32)
    dx_ref[...] = dx.astype(dx_ref.dtype)


def _head_impl(x, w0, b0, w1, b1):
    return _row_pallas(_head_fwd_kernel, [x],
                       [w0, b0.reshape(1, -1), w1, b1.reshape(1, -1)],
                       [(w1.shape[1], jnp.float32)])


@jax.custom_vjp
def head_mlp(x, w0, b0, w1, b1):
    return _head_impl(x, w0, b0, w1, b1)


def _head_fwd_rule(x, w0, b0, w1, b1):
    return _head_impl(x, w0, b0, w1, b1), (x, w0, b0, w1)


def _head_bwd_rule(res, g):
    x, w0, b0, w1 = res
    dx = _row_pallas(_head_bwd_kernel, [g, x], [w0, b0.reshape(1, -1), w1],
                     [(x.shape[1], x.dtype)])
    # Weight/bias grads in plain JAX: dead code for forces -> DCE'd under jit.
    xf = x.astype(jnp.float32)
    z0 = xf @ w0 + b0
    a0 = _silu_jnp(z0)
    dw1 = lax.dot_general(a0, g, _DN_TN)
    db1 = jnp.sum(g, axis=0)
    dz0 = lax.dot_general(g, w1, _DN_NT) * _dsilu_jnp(z0)
    dw0 = lax.dot_general(xf, dz0, _DN_TN)
    db0 = jnp.sum(dz0, axis=0)
    return dx, dw0, db0, dw1, db1


head_mlp.defvjp(_head_fwd_rule, _head_bwd_rule)


# ----------------------------------------------------------------------------
# Deterministic parameter initialization (synthetic weights).
# ----------------------------------------------------------------------------
def init_params(key, *, num_elements=5, attr_dim=8, hidden=32, num_rbf=16,
                num_targets=3, num_conv=3, cutoff=5.0):
    keys = iter(jax.random.split(key, 64))

    def w(shape, scale=0.1):
        return scale * jax.random.normal(next(keys), shape, dtype=jnp.float32)

    params = {
        "elem_embed": w((num_elements, attr_dim), 1.0),          # layer_dict['elem_embed']
        "W_embed": w((attr_dim, hidden)),                        # layer_dict['first_atom_embed']
        "b_embed": jnp.zeros((hidden,), jnp.float32),
        "rbf_centers": jnp.linspace(0.0, cutoff, num_rbf).astype(jnp.float32),
        "rbf_gamma": jnp.float32(10.0 / cutoff),                 # layer_dict['radial_basis']
        "conv": [],
        # post_conv:0 / post_conv:1
        "W_pc0": w((hidden, hidden // 2)),
        "b_pc0": jnp.zeros((hidden // 2,), jnp.float32),
        "W_pc1": w((hidden // 2, num_targets)),
        "b_pc1": jnp.zeros((num_targets,), jnp.float32),
        # registered buffers (energy_scaling_coeff / energy_shifting_coeff), shape [1, T]
        "energy_scale": jnp.array([[1.0, 2.0, 0.5]], jnp.float32)[:, :num_targets],
        "energy_shift": jnp.array([[0.1, -0.2, 0.3]], jnp.float32)[:, :num_targets],
    }
    k_msg = hidden + attr_dim + num_rbf + 3                      # concat([h, x_attr, rbf, sh])
    for _ in range(num_conv):                                    # layer_dict['conv:0..2']
        params["conv"].append({
            "W_msg": w((k_msg, hidden)),          # single fused weight over the concat
            "b_msg": jnp.zeros((hidden,), jnp.float32),
            "W_upd": w((2 * hidden, hidden)),     # single fused weight over concat([h, agg])
            "b_upd": jnp.zeros((hidden,), jnp.float32),
        })
    return params


# ----------------------------------------------------------------------------
# Model forward (RepModule + OutputModule), energies as a function of pos.
# ----------------------------------------------------------------------------
def model_energies(pos, params, tags, edge_index, period_vec, batch,
                   per_config_dataset_idx, num_graphs):
    # --- RepModule ---
    x_attr = params["elem_embed"][tags.squeeze(-1)]                       # [N, A]
    h = linear_layer(x_attr, params["W_embed"], params["b_embed"])        # [N, H] f32

    src, dst = edge_index[0], edge_index[1]
    edge_vec = pos[dst] - pos[src] + period_vec                           # [E, 3]
    edge_len = jnp.sqrt(jnp.sum(edge_vec ** 2, axis=-1, keepdims=True) + 1e-12)
    edge_sh = edge_vec / edge_len                                         # [E, 3]
    rbf = jnp.exp(-params["rbf_gamma"]
                  * (edge_len - params["rbf_centers"][None, :]) ** 2)     # [E, R]

    x_attr_src = x_attr[src]                                              # [E, A] (pos-indep.)
    for lp in params["conv"]:
        # One fused bf16 operand per step; a single MXU dot per tile inside the kernel.
        x_msg = jnp.concatenate([h[src], x_attr_src, rbf, edge_sh],
                                axis=-1).astype(jnp.bfloat16)             # [E, H+A+R+3]
        msg = mlp_silu(x_msg, lp["W_msg"], lp["b_msg"])                   # [E, H] f32
        agg = jax.ops.segment_sum(msg, dst, num_segments=h.shape[0])      # [N, H]
        x_upd = jnp.concatenate([h, agg], axis=-1).astype(jnp.bfloat16)   # [N, 2H]
        h = h + mlp_silu(x_upd, lp["W_upd"], lp["b_upd"])                 # residual in f32

    # --- OutputModule ---  (energy_scale folded into the head's second layer)
    w1 = params["W_pc1"] * params["energy_scale"]
    b1 = params["b_pc1"] * params["energy_scale"][0]
    node_e = head_mlp(h.astype(jnp.bfloat16), params["W_pc0"], params["b_pc0"],
                      w1, b1)                                             # [N, T]
    if node_e.shape[-1] == 1:                                             # torch squeeze(-1)
        node_e = jnp.squeeze(node_e, -1)
    per_graph = jax.ops.segment_sum(node_e, batch, num_segments=num_graphs)  # [G, T]
    energies = per_graph + params["energy_shift"]
    energies = energies[jnp.arange(num_graphs), per_config_dataset_idx]   # [G]
    return energies


@functools.partial(jax.jit, static_argnames=("num_graphs",))
def nl_model_apply(params, tags, pos, edge_index, period_vec, batch,
                   per_config_dataset_idx, num_graphs):
    energy_fn = lambda p: model_energies(
        p, params, tags, edge_index, period_vec, batch,
        per_config_dataset_idx, num_graphs)
    energies, pullback = jax.vjp(energy_fn, pos)
    (dpos,) = pullback(jnp.ones_like(energies))   # grad_outputs = ones
    forces = -dpos
    return energies, forces


# ----------------------------------------------------------------------------
if __name__ == "__main__":
    key = jax.random.PRNGKey(0)
    k_p, k_pos, k_tag, k_src, k_dst, k_pv = jax.random.split(key, 6)

    N, E, G = 16, 48, 2          # nodes, edges, graphs
    NUM_TARGETS = 3

    params = init_params(k_p, num_targets=NUM_TARGETS)

    pos = jax.random.normal(k_pos, (N, 3), dtype=jnp.float32) * 2.0        # data.pos
    tags = jax.random.randint(k_tag, (N, 1), 0, 5, dtype=jnp.int32)        # data.tags
    batch = jnp.concatenate([jnp.zeros(N // 2, jnp.int32),
                             jnp.ones(N - N // 2, jnp.int32)])             # data.batch
    # edges kept within each graph's node range
    src0 = jax.random.randint(k_src, (E // 2,), 0, N // 2, dtype=jnp.int32)
    dst0 = jax.random.randint(k_dst, (E // 2,), 0, N // 2, dtype=jnp.int32)
    src1 = jax.random.randint(k_src, (E // 2,), N // 2, N, dtype=jnp.int32)
    dst1 = jax.random.randint(k_dst, (E // 2,), N // 2, N, dtype=jnp.int32)
    edge_index = jnp.stack([jnp.concatenate([src0, src1]),
                            jnp.concatenate([dst0, dst1])])                 # data.edge_index [2, E]
    period_vec = 0.1 * jax.random.normal(k_pv, (E, 3), dtype=jnp.float32)   # data.periodic_vec
    per_config_dataset_idx = jnp.array([0, 2], jnp.int32)                   # one head per graph

    energies, forces = nl_model_apply(params, tags, pos, edge_index, period_vec,
                                      batch, per_config_dataset_idx, num_graphs=G)
    jax.block_until_ready((energies, forces))

    assert energies.shape == (G,)
    assert forces.shape == (N, 3)
    assert jnp.all(jnp.isfinite(energies)) and jnp.all(jnp.isfinite(forces))
    print("KERNEL_OK")
</pallas_src>

<mosaic_0001>
module attributes {stable_mosaic.version = 11 : i64} {
  func.func @_linear_fwd_kernel(%arg0: i32, %arg1: memref<16x8xf32, #tpu.memory_space<vmem>>, %arg2: memref<8x32xf32, #tpu.memory_space<vmem>>, %arg3: memref<1x32xf32, #tpu.memory_space<vmem>>, %arg4: memref<16x32xf32, #tpu.memory_space<vmem>>) attributes {dimension_semantics = [#tpu.dimension_semantics<parallel>], iteration_bounds = array<i64: 1>, scalar_prefetch = 0 : i64, scratch_operands = 0 : i64, tpu.core_type = #tpu.core_type<tc>, window_params = [{transform_indices = @transform_0, window_bounds = array<i64: 16, 8>}, {pipeline_mode = #tpu.pipeline_mode<synchronous>, transform_indices = @transform_1, window_bounds = array<i64: 8, 32>}, {pipeline_mode = #tpu.pipeline_mode<synchronous>, transform_indices = @transform_2, window_bounds = array<i64: 1, 32>}, {transform_indices = @transform_3, window_bounds = array<i64: 16, 32>}]} {
    %c0 = arith.constant 0 : index
    %c0_0 = arith.constant 0 : index
    %0 = vector.load %arg1[%c0, %c0_0] : memref<16x8xf32, #tpu.memory_space<vmem>>, vector<16x8xf32>
    %1 = arith.truncf %0 : vector<16x8xf32> to vector<16x8xbf16>
    %c0_1 = arith.constant 0 : index
    %c0_2 = arith.constant 0 : index
    %2 = vector.load %arg2[%c0_1, %c0_2] : memref<8x32xf32, #tpu.memory_space<vmem>>, vector<8x32xf32>
    %3 = arith.truncf %2 : vector<8x32xf32> to vector<8x32xbf16>
    %cst = arith.constant dense<0.000000e+00> : vector<16x32xf32>
    %4 = tpu.matmul %1, %3, %cst {dimension_numbers = #tpu.dot_dimension_numbers<[1], [0], [0], [1], [0, 0, 1, 1], [], []>} : vector<16x8xbf16>, vector<8x32xbf16>, vector<16x32xf32> -> vector<16x32xf32>
    %c0_3 = arith.constant 0 : index
    %c0_4 = arith.constant 0 : index
    %5 = vector.load %arg3[%c0_3, %c0_4] : memref<1x32xf32, #tpu.memory_space<vmem>>, vector<1x32xf32>
    %6 = vector.broadcast %5 : vector<1x32xf32> to vector<16x32xf32>
    %7 = arith.addf %4, %6 : vector<16x32xf32>
    %c0_5 = arith.constant 0 : index
    %c0_6 = arith.constant 0 : index
    %8 = vector.load %arg4[%c0_5, %c0_6] : memref<16x32xf32, #tpu.memory_space<vmem>>, vector<16x32xf32>
    tpu.vector_store %arg4[%c0_5, %c0_6], %7 {strides = array<i32>} : memref<16x32xf32, #tpu.memory_space<vmem>>, vector<16x32xf32>,
    return
  }
  func.func @transform_0(%arg0: i32) -> (i32, i32) {
    %c0_i32 = arith.constant 0 : i32
    %c0_i32_0 = arith.constant 0 : i32
    return %arg0, %c0_i32 : i32, i32
  }
  func.func @transform_1(%arg0: i32) -> (i32, i32) {
    %c0_i32 = arith.constant 0 : i32
    %c0_i32_0 = arith.constant 0 : i32
    %c0_i32_1 = arith.constant 0 : i32
    return %c0_i32, %c0_i32_0 : i32, i32
  }
  func.func @transform_2(%arg0: i32) -> (i32, i32) {
    %c0_i32 = arith.constant 0 : i32
    %c0_i32_0 = arith.constant 0 : i32
    %c0_i32_1 = arith.constant 0 : i32
    return %c0_i32, %c0_i32_0 : i32, i32
  }
  func.func @transform_3(%arg0: i32) -> (i32, i32) {
    %c0_i32 = arith.constant 0 : i32
    %c0_i32_0 = arith.constant 0 : i32
    return %arg0, %c0_i32 : i32, i32
  }
}

module attributes {stable_mosaic.version = 11 : i64} {
  func.func @_mlp_silu_fwd_kernel(%arg0: i32, %arg1: memref<16x59xbf16, #tpu.memory_space<vmem>>, %arg2: memref<59x32xf32, #tpu.memory_space<vmem>>, %arg3: memref<1x32xf32, #tpu.memory_space<vmem>>, %arg4: memref<16x32xf32, #tpu.memory_space<vmem>>) attributes {dimension_semantics = [#tpu.dimension_semantics<parallel>], iteration_bounds = array<i64: 3>, scalar_prefetch = 0 : i64, scratch_operands = 0 : i64, tpu.core_type = #tpu.core_type<tc>, window_params = [{transform_indices = @transform_0, window_bounds = array<i64: 16, 59>}, {pipeline_mode = #tpu.pipeline_mode<synchronous>, transform_indices = @transform_1, window_bounds = array<i64: 59, 32>}, {pipeline_mode = #tpu.pipeline_mode<synchronous>, transform_indices = @transform_2, window_bounds = array<i64: 1, 32>}, {transform_indices = @transform_3, window_bounds = array<i64: 16, 32>}]} {
    %c0 = arith.constant 0 : index
    %c0_0 = arith.constant 0 : index
    %0 = vector.load %arg2[%c0, %c0_0] : memref<59x32xf32, #tpu.memory_space<vmem>>, vector<59x32xf32>
    %1 = arith.truncf %0 : vector<59x32xf32> to vector<59x32xbf16>
    %c0_1 = arith.constant 0 : index
    %c0_2 = arith.constant 0 : index
    %2 = vector.load %arg1[%c0_1, %c0_2] : memref<16x59xbf16, #tpu.memory_space<vmem>>, vector<16x59xbf16>
    %cst = arith.constant dense<0.000000e+00> : vector<16x32xf32>
    %3 = tpu.matmul %2, %1, %cst {dimension_numbers = #tpu.dot_dimension_numbers<[1], [0], [0], [1], [0, 0, 1, 1], [], []>} : vector<16x59xbf16>, vector<59x32xbf16>, vector<16x32xf32> -> vector<16x32xf32>
    %c0_3 = arith.constant 0 : index
    %c0_4 = arith.constant 0 : index
    %4 = vector.load %arg3[%c0_3, %c0_4] : memref<1x32xf32, #tpu.memory_space<vmem>>, vector<1x32xf32>
    %5 = vector.broadcast %4 : vector<1x32xf32> to vector<16x32xf32>
    %6 = arith.addf %3, %5 : vector<16x32xf32>
    %cst_5 = arith.constant 0.000000e+00 : f32
    %7 = vector.broadcast %cst_5 : f32 to vector<16x32xf32>
    %8 = arith.subf %7, %6 : vector<16x32xf32>
    %9 = math.exp %8 : vector<16x32xf32>
    %cst_6 = arith.constant 1.000000e+00 : f32
    %10 = vector.broadcast %cst_6 : f32 to vector<16x32xf32>
    %11 = arith.addf %10, %9 : vector<16x32xf32>
    %12 = tpu.reciprocal %11 {approx = true} : vector<16x32xf32> -> vector<16x32xf32>
    %13 = arith.mulf %6, %12 : vector<16x32xf32>
    %c0_7 = arith.constant 0 : index
    %c0_8 = arith.constant 0 : index
    %14 = vector.load %arg4[%c0_7, %c0_8] : memref<16x32xf32, #tpu.memory_space<vmem>>, vector<16x32xf32>
    tpu.vector_store %arg4[%c0_7, %c0_8], %13 {strides = array<i32>} : memref<16x32xf32, #tpu.memory_space<vmem>>, vector<16x32xf32>,
    return
  }
  func.func @transform_0(%arg0: i32) -> (i32, i32) {
    %c0_i32 = arith.constant 0 : i32
    %c0_i32_0 = arith.constant 0 : i32
    return %arg0, %c0_i32 : i32, i32
  }
  func.func @transform_1(%arg0: i32) -> (i32, i32) {
    %c0_i32 = arith.constant 0 : i32
    %c0_i32_0 = arith.constant 0 : i32
    %c0_i32_1 = arith.constant 0 : i32
    return %c0_i32, %c0_i32_0 : i32, i32
  }
  func.func @transform_2(%arg0: i32) -> (i32, i32) {
    %c0_i32 = arith.constant 0 : i32
    %c0_i32_0 = arith.constant 0 : i32
    %c0_i32_1 = arith.constant 0 : i32
    return %c0_i32, %c0_i32_0 : i32, i32
  }
  func.func @transform_3(%arg0: i32) -> (i32, i32) {
    %c0_i32 = arith.constant 0 : i32
    %c0_i32_0 = arith.constant 0 : i32
    return %arg0, %c0_i32 : i32, i32
  }
}

module attributes {stable_mosaic.version = 11 : i64} {
  func.func @_mlp_silu_fwd_kernel(%arg0: i32, %arg1: memref<16x64xbf16, #tpu.memory_space<vmem>>, %arg2: memref<64x32xf32, #tpu.memory_space<vmem>>, %arg3: memref<1x32xf32, #tpu.memory_space<vmem>>, %arg4: memref<16x32xf32, #tpu.memory_space<vmem>>) attributes {dimension_semantics = [#tpu.dimension_semantics<parallel>], iteration_bounds = array<i64: 1>, scalar_prefetch = 0 : i64, scratch_operands = 0 : i64, tpu.core_type = #tpu.core_type<tc>, window_params = [{transform_indices = @transform_0, window_bounds = array<i64: 16, 64>}, {pipeline_mode = #tpu.pipeline_mode<synchronous>, transform_indices = @transform_1, window_bounds = array<i64: 64, 32>}, {pipeline_mode = #tpu.pipeline_mode<synchronous>, transform_indices = @transform_2, window_bounds = array<i64: 1, 32>}, {transform_indices = @transform_3, window_bounds = array<i64: 16, 32>}]} {
    %c0 = arith.constant 0 : index
    %c0_0 = arith.constant 0 : index
    %0 = vector.load %arg2[%c0, %c0_0] : memref<64x32xf32, #tpu.memory_space<vmem>>, vector<64x32xf32>
    %1 = arith.truncf %0 : vector<64x32xf32> to vector<64x32xbf16>
    %c0_1 = arith.constant 0 : index
    %c0_2 = arith.constant 0 : index
    %2 = vector.load %arg1[%c0_1, %c0_2] : memref<16x64xbf16, #tpu.memory_space<vmem>>, vector<16x64xbf16>
    %cst = arith.constant dense<0.000000e+00> : vector<16x32xf32>
    %3 = tpu.matmul %2, %1, %cst {dimension_numbers = #tpu.dot_dimension_numbers<[1], [0], [0], [1], [0, 0, 1, 1], [], []>} : vector<16x64xbf16>, vector<64x32xbf16>, vector<16x32xf32> -> vector<16x32xf32>
    %c0_3 = arith.constant 0 : index
    %c0_4 = arith.constant 0 : index
    %4 = vector.load %arg3[%c0_3, %c0_4] : memref<1x32xf32, #tpu.memory_space<vmem>>, vector<1x32xf32>
    %5 = vector.broadcast %4 : vector<1x32xf32> to vector<16x32xf32>
    %6 = arith.addf %3, %5 : vector<16x32xf32>
    %cst_5 = arith.constant 0.000000e+00 : f32
    %7 = vector.broadcast %cst_5 : f32 to vector<16x32xf32>
    %8 = arith.subf %7, %6 : vector<16x32xf32>
    %9 = math.exp %8 : vector<16x32xf32>
    %cst_6 = arith.constant 1.000000e+00 : f32
    %10 = vector.broadcast %cst_6 : f32 to vector<16x32xf32>
    %11 = arith.addf %10, %9 : vector<16x32xf32>
    %12 = tpu.reciprocal %11 {approx = true} : vector<16x32xf32> -> vector<16x32xf32>
    %13 = arith.mulf %6, %12 : vector<16x32xf32>
    %c0_7 = arith.constant 0 : index
    %c0_8 = arith.constant 0 : index
    %14 = vector.load %arg4[%c0_7, %c0_8] : memref<16x32xf32, #tpu.memory_space<vmem>>, vector<16x32xf32>
    tpu.vector_store %arg4[%c0_7, %c0_8], %13 {strides = array<i32>} : memref<16x32xf32, #tpu.memory_space<vmem>>, vector<16x32xf32>,
    return
  }
  func.func @transform_0(%arg0: i32) -> (i32, i32) {
    %c0_i32 = arith.constant 0 : i32
    %c0_i32_0 = arith.constant 0 : i32
    return %arg0, %c0_i32 : i32, i32
  }
  func.func @transform_1(%arg0: i32) -> (i32, i32) {
    %c0_i32 = arith.constant 0 : i32
    %c0_i32_0 = arith.constant 0 : i32
    %c0_i32_1 = arith.constant 0 : i32
    return %c0_i32, %c0_i32_0 : i32, i32
  }
  func.func @transform_2(%arg0: i32) -> (i32, i32) {
    %c0_i32 = arith.constant 0 : i32
    %c0_i32_0 = arith.constant 0 : i32
    %c0_i32_1 = arith.constant 0 : i32
    return %c0_i32, %c0_i32_0 : i32, i32
  }
  func.func @transform_3(%arg0: i32) -> (i32, i32) {
    %c0_i32 = arith.constant 0 : i32
    %c0_i32_0 = arith.constant 0 : i32
    return %arg0, %c0_i32 : i32, i32
  }
}

module attributes {stable_mosaic.version = 11 : i64} {
  func.func @_head_fwd_kernel(%arg0: i32, %arg1: memref<16x32xbf16, #tpu.memory_space<vmem>>, %arg2: memref<32x16xf32, #tpu.memory_space<vmem>>, %arg3: memref<1x16xf32, #tpu.memory_space<vmem>>, %arg4: memref<16x3xf32, #tpu.memory_space<vmem>>, %arg5: memref<1x3xf32, #tpu.memory_space<vmem>>, %arg6: memref<16x3xf32, #tpu.memory_space<vmem>>) attributes {dimension_semantics = [#tpu.dimension_semantics<parallel>], iteration_bounds = array<i64: 1>, scalar_prefetch = 0 : i64, scratch_operands = 0 : i64, tpu.core_type = #tpu.core_type<tc>, window_params = [{transform_indices = @transform_0, window_bounds = array<i64: 16, 32>}, {pipeline_mode = #tpu.pipeline_mode<synchronous>, transform_indices = @transform_1, window_bounds = array<i64: 32, 16>}, {pipeline_mode = #tpu.pipeline_mode<synchronous>, transform_indices = @transform_2, window_bounds = array<i64: 1, 16>}, {pipeline_mode = #tpu.pipeline_mode<synchronous>, transform_indices = @transform_3, window_bounds = array<i64: 16, 3>}, {pipeline_mode = #tpu.pipeline_mode<synchronous>, transform_indices = @transform_4, window_bounds = array<i64: 1, 3>}, {transform_indices = @transform_5, window_bounds = array<i64: 16, 3>}]} {
    %c0 = arith.constant 0 : index
    %c0_0 = arith.constant 0 : index
    %0 = vector.load %arg2[%c0, %c0_0] : memref<32x16xf32, #tpu.memory_space<vmem>>, vector<32x16xf32>
    %1 = arith.truncf %0 : vector<32x16xf32> to vector<32x16xbf16>
    %c0_1 = arith.constant 0 : index
    %c0_2 = arith.constant 0 : index
    %2 = vector.load %arg4[%c0_1, %c0_2] : memref<16x3xf32, #tpu.memory_space<vmem>>, vector<16x3xf32>
    %3 = arith.truncf %2 : vector<16x3xf32> to vector<16x3xbf16>
    %c0_3 = arith.constant 0 : index
    %c0_4 = arith.constant 0 : index
    %4 = vector.load %arg1[%c0_3, %c0_4] : memref<16x32xbf16, #tpu.memory_space<vmem>>, vector<16x32xbf16>
    %cst = arith.constant dense<0.000000e+00> : vector<16x16xf32>
    %5 = tpu.matmul %4, %1, %cst {dimension_numbers = #tpu.dot_dimension_numbers<[1], [0], [0], [1], [0, 0, 1, 1], [], []>} : vector<16x32xbf16>, vector<32x16xbf16>, vector<16x16xf32> -> vector<16x16xf32>
    %c0_5 = arith.constant 0 : index
    %c0_6 = arith.constant 0 : index
    %6 = vector.load %arg3[%c0_5, %c0_6] : memref<1x16xf32, #tpu.memory_space<vmem>>, vector<1x16xf32>
    %7 = vector.broadcast %6 : vector<1x16xf32> to vector<16x16xf32>
    %8 = arith.addf %5, %7 : vector<16x16xf32>
    %cst_7 = arith.constant 0.000000e+00 : f32
    %9 = vector.broadcast %cst_7 : f32 to vector<16x16xf32>
    %10 = arith.subf %9, %8 : vector<16x16xf32>
    %11 = math.exp %10 : vector<16x16xf32>
    %cst_8 = arith.constant 1.000000e+00 : f32
    %12 = vector.broadcast %cst_8 : f32 to vector<16x16xf32>
    %13 = arith.addf %12, %11 : vector<16x16xf32>
    %14 = tpu.reciprocal %13 {approx = true} : vector<16x16xf32> -> vector<16x16xf32>
    %15 = arith.mulf %8, %14 : vector<16x16xf32>
    %16 = arith.truncf %15 : vector<16x16xf32> to vector<16x16xbf16>
    %cst_9 = arith.constant dense<0.000000e+00> : vector<16x3xf32>
    %17 = tpu.matmul %16, %3, %cst_9 {dimension_numbers = #tpu.dot_dimension_numbers<[1], [0], [0], [1], [0, 0, 1, 1], [], []>} : vector<16x16xbf16>, vector<16x3xbf16>, vector<16x3xf32> -> vector<16x3xf32>
    %c0_10 = arith.constant 0 : index
    %c0_11 = arith.constant 0 : index
    %18 = vector.load %arg5[%c0_10, %c0_11] : memref<1x3xf32, #tpu.memory_space<vmem>>, vector<1x3xf32>
    %19 = vector.broadcast %18 : vector<1x3xf32> to vector<16x3xf32>
    %20 = arith.addf %17, %19 : vector<16x3xf32>
    %c0_12 = arith.constant 0 : index
    %c0_13 = arith.constant 0 : index
    %21 = vector.load %arg6[%c0_12, %c0_13] : memref<16x3xf32, #tpu.memory_space<vmem>>, vector<16x3xf32>
    tpu.vector_store %arg6[%c0_12, %c0_13], %20 {strides = array<i32>} : memref<16x3xf32, #tpu.memory_space<vmem>>, vector<16x3xf32>,
    return
  }
  func.func @transform_0(%arg0: i32) -> (i32, i32) {
    %c0_i32 = arith.constant 0 : i32
    %c0_i32_0 = arith.constant 0 : i32
    return %arg0, %c0_i32 : i32, i32
  }
  func.func @transform_1(%arg0: i32) -> (i32, i32) {
    %c0_i32 = arith.constant 0 : i32
    %c0_i32_0 = arith.constant 0 : i32
    %c0_i32_1 = arith.constant 0 : i32
    return %c0_i32, %c0_i32_0 : i32, i32
  }
  func.func @transform_2(%arg0: i32) -> (i32, i32) {
    %c0_i32 = arith.constant 0 : i32
    %c0_i32_0 = arith.constant 0 : i32
    %c0_i32_1 = arith.constant 0 : i32
    return %c0_i32, %c0_i32_0 : i32, i32
  }
  func.func @transform_3(%arg0: i32) -> (i32, i32) {
    %c0_i32 = arith.constant 0 : i32
    %c0_i32_0 = arith.constant 0 : i32
    %c0_i32_1 = arith.constant 0 : i32
    return %c0_i32, %c0_i32_0 : i32, i32
  }
  func.func @transform_4(%arg0: i32) -> (i32, i32) {
    %c0_i32 = arith.constant 0 : i32
    %c0_i32_0 = arith.constant 0 : i32
    %c0_i32_1 = arith.constant 0 : i32
    return %c0_i32, %c0_i32_0 : i32, i32
  }
  func.func @transform_5(%arg0: i32) -> (i32, i32) {
    %c0_i32 = arith.constant 0 : i32
    %c0_i32_0 = arith.constant 0 : i32
    return %arg0, %c0_i32 : i32, i32
  }
}

module attributes {stable_mosaic.version = 11 : i64} {
  func.func @_head_bwd_kernel(%arg0: i32, %arg1: memref<16x3xf32, #tpu.memory_space<vmem>>, %arg2: memref<16x32xbf16, #tpu.memory_space<vmem>>, %arg3: memref<32x16xf32, #tpu.memory_space<vmem>>, %arg4: memref<1x16xf32, #tpu.memory_space<vmem>>, %arg5: memref<16x3xf32, #tpu.memory_space<vmem>>, %arg6: memref<16x32xbf16, #tpu.memory_space<vmem>>) attributes {dimension_semantics = [#tpu.dimension_semantics<parallel>], iteration_bounds = array<i64: 1>, scalar_prefetch = 0 : i64, scratch_operands = 0 : i64, tpu.core_type = #tpu.core_type<tc>, window_params = [{transform_indices = @transform_0, window_bounds = array<i64: 16, 3>}, {transform_indices = @transform_1, window_bounds = array<i64: 16, 32>}, {pipeline_mode = #tpu.pipeline_mode<synchronous>, transform_indices = @transform_2, window_bounds = array<i64: 32, 16>}, {pipeline_mode = #tpu.pipeline_mode<synchronous>, transform_indices = @transform_3, window_bounds = array<i64: 1, 16>}, {pipeline_mode = #tpu.pipeline_mode<synchronous>, transform_indices = @transform_4, window_bounds = array<i64: 16, 3>}, {transform_indices = @transform_5, window_bounds = array<i64: 16, 32>}]} {
    %c0 = arith.constant 0 : index
    %c0_0 = arith.constant 0 : index
    %0 = vector.load %arg3[%c0, %c0_0] : memref<32x16xf32, #tpu.memory_space<vmem>>, vector<32x16xf32>
    %1 = arith.truncf %0 : vector<32x16xf32> to vector<32x16xbf16>
    %c0_1 = arith.constant 0 : index
    %c0_2 = arith.constant 0 : index
    %2 = vector.load %arg5[%c0_1, %c0_2] : memref<16x3xf32, #tpu.memory_space<vmem>>, vector<16x3xf32>
    %3 = arith.truncf %2 : vector<16x3xf32> to vector<16x3xbf16>
    %c0_3 = arith.constant 0 : index
    %c0_4 = arith.constant 0 : index
    %4 = vector.load %arg2[%c0_3, %c0_4] : memref<16x32xbf16, #tpu.memory_space<vmem>>, vector<16x32xbf16>
    %cst = arith.constant dense<0.000000e+00> : vector<16x16xf32>
    %5 = tpu.matmul %4, %1, %cst {dimension_numbers = #tpu.dot_dimension_numbers<[1], [0], [0], [1], [0, 0, 1, 1], [], []>} : vector<16x32xbf16>, vector<32x16xbf16>, vector<16x16xf32> -> vector<16x16xf32>
    %c0_5 = arith.constant 0 : index
    %c0_6 = arith.constant 0 : index
    %6 = vector.load %arg4[%c0_5, %c0_6] : memref<1x16xf32, #tpu.memory_space<vmem>>, vector<1x16xf32>
    %7 = vector.broadcast %6 : vector<1x16xf32> to vector<16x16xf32>
    %8 = arith.addf %5, %7 : vector<16x16xf32>
    %c0_7 = arith.constant 0 : index
    %c0_8 = arith.constant 0 : index
    %9 = vector.load %arg1[%c0_7, %c0_8] : memref<16x3xf32, #tpu.memory_space<vmem>>, vector<16x3xf32>
    %10 = arith.truncf %9 : vector<16x3xf32> to vector<16x3xbf16>
    %cst_9 = arith.constant dense<0.000000e+00> : vector<16x16xf32>
    %11 = tpu.matmul %10, %3, %cst_9 {dimension_numbers = #tpu.dot_dimension_numbers<[1], [1], [0], [0], [0, 0, 1, 0], [], []>} : vector<16x3xbf16>, vector<16x3xbf16>, vector<16x16xf32> -> vector<16x16xf32>
    %cst_10 = arith.constant 0.000000e+00 : f32
    %12 = vector.broadcast %cst_10 : f32 to vector<16x16xf32>
    %13 = arith.subf %12, %8 : vector<16x16xf32>
    %14 = math.exp %13 : vector<16x16xf32>
    %cst_11 = arith.constant 1.000000e+00 : f32
    %15 = vector.broadcast %cst_11 : f32 to vector<16x16xf32>
    %16 = arith.addf %15, %14 : vector<16x16xf32>
    %17 = tpu.reciprocal %16 {approx = true} : vector<16x16xf32> -> vector<16x16xf32>
    %cst_12 = arith.constant 1.000000e+00 : f32
    %18 = vector.broadcast %cst_12 : f32 to vector<16x16xf32>
    %19 = arith.subf %18, %17 : vector<16x16xf32>
    %20 = arith.mulf %8, %19 : vector<16x16xf32>
    %cst_13 = arith.constant 1.000000e+00 : f32
    %21 = vector.broadcast %cst_13 : f32 to vector<16x16xf32>
    %22 = arith.addf %21, %20 : vector<16x16xf32>
    %23 = arith.mulf %17, %22 : vector<16x16xf32>
    %24 = arith.mulf %11, %23 : vector<16x16xf32>
    %25 = arith.truncf %24 : vector<16x16xf32> to vector<16x16xbf16>
    %cst_14 = arith.constant dense<0.000000e+00> : vector<16x32xf32>
    %26 = tpu.matmul %25, %1, %cst_14 {dimension_numbers = #tpu.dot_dimension_numbers<[1], [1], [0], [0], [0, 0, 1, 0], [], []>} : vector<16x16xbf16>, vector<32x16xbf16>, vector<16x32xf32> -> vector<16x32xf32>
    %27 = arith.truncf %26 : vector<16x32xf32> to vector<16x32xbf16>
    %c0_15 = arith.constant 0 : index
    %c0_16 = arith.constant 0 : index
    %28 = vector.load %arg6[%c0_15, %c0_16] : memref<16x32xbf16, #tpu.memory_space<vmem>>, vector<16x32xbf16>
    tpu.vector_store %arg6[%c0_15, %c0_16], %27 {strides = array<i32>} : memref<16x32xbf16, #tpu.memory_space<vmem>>, vector<16x32xbf16>,
    return
  }
  func.func @transform_0(%arg0: i32) -> (i32, i32) {
    %c0_i32 = arith.constant 0 : i32
    %c0_i32_0 = arith.constant 0 : i32
    return %arg0, %c0_i32 : i32, i32
  }
  func.func @transform_1(%arg0: i32) -> (i32, i32) {
    %c0_i32 = arith.constant 0 : i32
    %c0_i32_0 = arith.constant 0 : i32
    return %arg0, %c0_i32 : i32, i32
  }
  func.func @transform_2(%arg0: i32) -> (i32, i32) {
    %c0_i32 = arith.constant 0 : i32
    %c0_i32_0 = arith.constant 0 : i32
    %c0_i32_1 = arith.constant 0 : i32
    return %c0_i32, %c0_i32_0 : i32, i32
  }
  func.func @transform_3(%arg0: i32) -> (i32, i32) {
    %c0_i32 = arith.constant 0 : i32
    %c0_i32_0 = arith.constant 0 : i32
    %c0_i32_1 = arith.constant 0 : i32
    return %c0_i32, %c0_i32_0 : i32, i32
  }
  func.func @transform_4(%arg0: i32) -> (i32, i32) {
    %c0_i32 = arith.constant 0 : i32
    %c0_i32_0 = arith.constant 0 : i32
    %c0_i32_1 = arith.constant 0 : i32
    return %c0_i32, %c0_i32_0 : i32, i32
  }
  func.func @transform_5(%arg0: i32) -> (i32, i32) {
    %c0_i32 = arith.constant 0 : i32
    %c0_i32_0 = arith.constant 0 : i32
    return %arg0, %c0_i32 : i32, i32
  }
}

module attributes {stable_mosaic.version = 11 : i64} {
  func.func @_mlp_silu_bwd_kernel(%arg0: i32, %arg1: memref<16x32xf32, #tpu.memory_space<vmem>>, %arg2: memref<16x64xbf16, #tpu.memory_space<vmem>>, %arg3: memref<64x32xf32, #tpu.memory_space<vmem>>, %arg4: memref<1x32xf32, #tpu.memory_space<vmem>>, %arg5: memref<16x64xbf16, #tpu.memory_space<vmem>>) attributes {dimension_semantics = [#tpu.dimension_semantics<parallel>], iteration_bounds = array<i64: 1>, scalar_prefetch = 0 : i64, scratch_operands = 0 : i64, tpu.core_type = #tpu.core_type<tc>, window_params = [{transform_indices = @transform_0, window_bounds = array<i64: 16, 32>}, {transform_indices = @transform_1, window_bounds = array<i64: 16, 64>}, {pipeline_mode = #tpu.pipeline_mode<synchronous>, transform_indices = @transform_2, window_bounds = array<i64: 64, 32>}, {pipeline_mode = #tpu.pipeline_mode<synchronous>, transform_indices = @transform_3, window_bounds = array<i64: 1, 32>}, {transform_indices = @transform_4, window_bounds = array<i64: 16, 64>}]} {
    %c0 = arith.constant 0 : index
    %c0_0 = arith.constant 0 : index
    %0 = vector.load %arg3[%c0, %c0_0] : memref<64x32xf32, #tpu.memory_space<vmem>>, vector<64x32xf32>
    %1 = arith.truncf %0 : vector<64x32xf32> to vector<64x32xbf16>
    %c0_1 = arith.constant 0 : index
    %c0_2 = arith.constant 0 : index
    %2 = vector.load %arg2[%c0_1, %c0_2] : memref<16x64xbf16, #tpu.memory_space<vmem>>, vector<16x64xbf16>
    %cst = arith.constant dense<0.000000e+00> : vector<16x32xf32>
    %3 = tpu.matmul %2, %1, %cst {dimension_numbers = #tpu.dot_dimension_numbers<[1], [0], [0], [1], [0, 0, 1, 1], [], []>} : vector<16x64xbf16>, vector<64x32xbf16>, vector<16x32xf32> -> vector<16x32xf32>
    %c0_3 = arith.constant 0 : index
    %c0_4 = arith.constant 0 : index
    %4 = vector.load %arg4[%c0_3, %c0_4] : memref<1x32xf32, #tpu.memory_space<vmem>>, vector<1x32xf32>
    %5 = vector.broadcast %4 : vector<1x32xf32> to vector<16x32xf32>
    %6 = arith.addf %3, %5 : vector<16x32xf32>
    %c0_5 = arith.constant 0 : index
    %c0_6 = arith.constant 0 : index
    %7 = vector.load %arg1[%c0_5, %c0_6] : memref<16x32xf32, #tpu.memory_space<vmem>>, vector<16x32xf32>
    %cst_7 = arith.constant 0.000000e+00 : f32
    %8 = vector.broadcast %cst_7 : f32 to vector<16x32xf32>
    %9 = arith.subf %8, %6 : vector<16x32xf32>
    %10 = math.exp %9 : vector<16x32xf32>
    %cst_8 = arith.constant 1.000000e+00 : f32
    %11 = vector.broadcast %cst_8 : f32 to vector<16x32xf32>
    %12 = arith.addf %11, %10 : vector<16x32xf32>
    %13 = tpu.reciprocal %12 {approx = true} : vector<16x32xf32> -> vector<16x32xf32>
    %cst_9 = arith.constant 1.000000e+00 : f32
    %14 = vector.broadcast %cst_9 : f32 to vector<16x32xf32>
    %15 = arith.subf %14, %13 : vector<16x32xf32>
    %16 = arith.mulf %6, %15 : vector<16x32xf32>
    %cst_10 = arith.constant 1.000000e+00 : f32
    %17 = vector.broadcast %cst_10 : f32 to vector<16x32xf32>
    %18 = arith.addf %17, %16 : vector<16x32xf32>
    %19 = arith.mulf %13, %18 : vector<16x32xf32>
    %20 = arith.mulf %7, %19 : vector<16x32xf32>
    %21 = arith.truncf %20 : vector<16x32xf32> to vector<16x32xbf16>
    %cst_11 = arith.constant dense<0.000000e+00> : vector<16x64xf32>
    %22 = tpu.matmul %21, %1, %cst_11 {dimension_numbers = #tpu.dot_dimension_numbers<[1], [1], [0], [0], [0, 0, 1, 0], [], []>} : vector<16x32xbf16>, vector<64x32xbf16>, vector<16x64xf32> -> vector<16x64xf32>
    %23 = arith.truncf %22 : vector<16x64xf32> to vector<16x64xbf16>
    %c0_12 = arith.constant 0 : index
    %c0_13 = arith.constant 0 : index
    %24 = vector.load %arg5[%c0_12, %c0_13] : memref<16x64xbf16, #tpu.memory_space<vmem>>, vector<16x64xbf16>
    tpu.vector_store %arg5[%c0_12, %c0_13], %23 {strides = array<i32>} : memref<16x64xbf16, #tpu.memory_space<vmem>>, vector<16x64xbf16>,
    return
  }
  func.func @transform_0(%arg0: i32) -> (i32, i32) {
    %c0_i32 = arith.constant 0 : i32
    %c0_i32_0 = arith.constant 0 : i32
    return %arg0, %c0_i32 : i32, i32
  }
  func.func @transform_1(%arg0: i32) -> (i32, i32) {
    %c0_i32 = arith.constant 0 : i32
    %c0_i32_0 = arith.constant 0 : i32
    return %arg0, %c0_i32 : i32, i32
  }
  func.func @transform_2(%arg0: i32) -> (i32, i32) {
    %c0_i32 = arith.constant 0 : i32
    %c0_i32_0 = arith.constant 0 : i32
    %c0_i32_1 = arith.constant 0 : i32
    return %c0_i32, %c0_i32_0 : i32, i32
  }
  func.func @transform_3(%arg0: i32) -> (i32, i32) {
    %c0_i32 = arith.constant 0 : i32
    %c0_i32_0 = arith.constant 0 : i32
    %c0_i32_1 = arith.constant 0 : i32
    return %c0_i32, %c0_i32_0 : i32, i32
  }
  func.func @transform_4(%arg0: i32) -> (i32, i32) {
    %c0_i32 = arith.constant 0 : i32
    %c0_i32_0 = arith.constant 0 : i32
    return %arg0, %c0_i32 : i32, i32
  }
}

module attributes {stable_mosaic.version = 11 : i64} {
  func.func @_mlp_silu_bwd_kernel(%arg0: i32, %arg1: memref<16x32xf32, #tpu.memory_space<vmem>>, %arg2: memref<16x59xbf16, #tpu.memory_space<vmem>>, %arg3: memref<59x32xf32, #tpu.memory_space<vmem>>, %arg4: memref<1x32xf32, #tpu.memory_space<vmem>>, %arg5: memref<16x59xbf16, #tpu.memory_space<vmem>>) attributes {dimension_semantics = [#tpu.dimension_semantics<parallel>], iteration_bounds = array<i64: 3>, scalar_prefetch = 0 : i64, scratch_operands = 0 : i64, tpu.core_type = #tpu.core_type<tc>, window_params = [{transform_indices = @transform_0, window_bounds = array<i64: 16, 32>}, {transform_indices = @transform_1, window_bounds = array<i64: 16, 59>}, {pipeline_mode = #tpu.pipeline_mode<synchronous>, transform_indices = @transform_2, window_bounds = array<i64: 59, 32>}, {pipeline_mode = #tpu.pipeline_mode<synchronous>, transform_indices = @transform_3, window_bounds = array<i64: 1, 32>}, {transform_indices = @transform_4, window_bounds = array<i64: 16, 59>}]} {
    %c0 = arith.constant 0 : index
    %c0_0 = arith.constant 0 : index
    %0 = vector.load %arg3[%c0, %c0_0] : memref<59x32xf32, #tpu.memory_space<vmem>>, vector<59x32xf32>
    %1 = arith.truncf %0 : vector<59x32xf32> to vector<59x32xbf16>
    %c0_1 = arith.constant 0 : index
    %c0_2 = arith.constant 0 : index
    %2 = vector.load %arg2[%c0_1, %c0_2] : memref<16x59xbf16, #tpu.memory_space<vmem>>, vector<16x59xbf16>
    %cst = arith.constant dense<0.000000e+00> : vector<16x32xf32>
    %3 = tpu.matmul %2, %1, %cst {dimension_numbers = #tpu.dot_dimension_numbers<[1], [0], [0], [1], [0, 0, 1, 1], [], []>} : vector<16x59xbf16>, vector<59x32xbf16>, vector<16x32xf32> -> vector<16x32xf32>
    %c0_3 = arith.constant 0 : index
    %c0_4 = arith.constant 0 : index
    %4 = vector.load %arg4[%c0_3, %c0_4] : memref<1x32xf32, #tpu.memory_space<vmem>>, vector<1x32xf32>
    %5 = vector.broadcast %4 : vector<1x32xf32> to vector<16x32xf32>
    %6 = arith.addf %3, %5 : vector<16x32xf32>
    %c0_5 = arith.constant 0 : index
    %c0_6 = arith.constant 0 : index
    %7 = vector.load %arg1[%c0_5, %c0_6] : memref<16x32xf32, #tpu.memory_space<vmem>>, vector<16x32xf32>
    %cst_7 = arith.constant 0.000000e+00 : f32
    %8 = vector.broadcast %cst_7 : f32 to vector<16x32xf32>
    %9 = arith.subf %8, %6 : vector<16x32xf32>
    %10 = math.exp %9 : vector<16x32xf32>
    %cst_8 = arith.constant 1.000000e+00 : f32
    %11 = vector.broadcast %cst_8 : f32 to vector<16x32xf32>
    %12 = arith.addf %11, %10 : vector<16x32xf32>
    %13 = tpu.reciprocal %12 {approx = true} : vector<16x32xf32> -> vector<16x32xf32>
    %cst_9 = arith.constant 1.000000e+00 : f32
    %14 = vector.broadcast %cst_9 : f32 to vector<16x32xf32>
    %15 = arith.subf %14, %13 : vector<16x32xf32>
    %16 = arith.mulf %6, %15 : vector<16x32xf32>
    %cst_10 = arith.constant 1.000000e+00 : f32
    %17 = vector.broadcast %cst_10 : f32 to vector<16x32xf32>
    %18 = arith.addf %17, %16 : vector<16x32xf32>
    %19 = arith.mulf %13, %18 : vector<16x32xf32>
    %20 = arith.mulf %7, %19 : vector<16x32xf32>
    %21 = arith.truncf %20 : vector<16x32xf32> to vector<16x32xbf16>
    %cst_11 = arith.constant dense<0.000000e+00> : vector<16x59xf32>
    %22 = tpu.matmul %21, %1, %cst_11 {dimension_numbers = #tpu.dot_dimension_numbers<[1], [1], [0], [0], [0, 0, 1, 0], [], []>} : vector<16x32xbf16>, vector<59x32xbf16>, vector<16x59xf32> -> vector<16x59xf32>
    %23 = arith.truncf %22 : vector<16x59xf32> to vector<16x59xbf16>
    %c0_12 = arith.constant 0 : index
    %c0_13 = arith.constant 0 : index
    %24 = vector.load %arg5[%c0_12, %c0_13] : memref<16x59xbf16, #tpu.memory_space<vmem>>, vector<16x59xbf16>
    tpu.vector_store %arg5[%c0_12, %c0_13], %23 {strides = array<i32>} : memref<16x59xbf16, #tpu.memory_space<vmem>>, vector<16x59xbf16>,
    return
  }
  func.func @transform_0(%arg0: i32) -> (i32, i32) {
    %c0_i32 = arith.constant 0 : i32
    %c0_i32_0 = arith.constant 0 : i32
    return %arg0, %c0_i32 : i32, i32
  }
  func.func @transform_1(%arg0: i32) -> (i32, i32) {
    %c0_i32 = arith.constant 0 : i32
    %c0_i32_0 = arith.constant 0 : i32
    return %arg0, %c0_i32 : i32, i32
  }
  func.func @transform_2(%arg0: i32) -> (i32, i32) {
    %c0_i32 = arith.constant 0 : i32
    %c0_i32_0 = arith.constant 0 : i32
    %c0_i32_1 = arith.constant 0 : i32
    return %c0_i32, %c0_i32_0 : i32, i32
  }
  func.func @transform_3(%arg0: i32) -> (i32, i32) {
    %c0_i32 = arith.constant 0 : i32
    %c0_i32_0 = arith.constant 0 : i32
    %c0_i32_1 = arith.constant 0 : i32
    return %c0_i32, %c0_i32_0 : i32, i32
  }
  func.func @transform_4(%arg0: i32) -> (i32, i32) {
    %c0_i32 = arith.constant 0 : i32
    %c0_i32_0 = arith.constant 0 : i32
    return %arg0, %c0_i32 : i32, i32
  }
}

</mosaic_0001>

<llo_original>
// kernel: jvp__.8
$region0: #{jvp__.8}
  #allocation0 [shape = 'u32[]', space=smem, size = 0x4, offset = 0x4, fixed_abs, tag = 'smem constant byte address 0x4 - core index']
  #allocation1 [shape = 'u32[72,128]{1,0:T(1,128)}', space=vmem, size = 0x9000, scoped, tag = 'internal scratch']
  %s0 = inlined_call_operand.vmem [shape: f32[16,8], index: 0, kind: input, shape index: {}]
  %s1 = inlined_call_operand.vmem [shape: f32[8,32], index: 1, kind: input, shape index: {}]
  %s2 = inlined_call_operand.vmem [shape: f32[1,32], index: 2, kind: input, shape index: {}]
  %s3 = inlined_call_operand.vmem [shape: f32[16,32], index: 3, kind: output, shape index: {}]
  %s4 = sld [smem:[#allocation0]]
  $region22: #{jvp__.8} parent=0
    _
  %s6 = ssub.s32 1, %s4
  %s7 = scalar_select 0, %s6, %s4
  // Predicated region
  $region2: #{jvp__.8} parent=0 // pred_check
    _
  $region3: #{jvp__.8} parent=0 // pred_check_branch
    %9 = sbr.rel (0) target = $region5
  $region4: #{jvp__.8} parent=0 // pred_region
    _
  $region5: #{jvp__.8} parent=0 // pred_fallthru
    _
  // Predicated region
  $region6: #{jvp__.8} parent=0 // pred_check
    _
  $region7: #{jvp__.8} parent=0 // pred_check_branch
    %11 = sbr.rel (0) target = $region9
  $region8: #{jvp__.8} parent=0 // pred_region
    _
  $region9: #{jvp__.8} parent=0 // pred_fallthru
    _
  // Predicated region
  $region10: #{jvp__.8} parent=0 // pred_check
    _
  $region11: #{jvp__.8} parent=0 // pred_check_branch
    %13 = sbr.rel (0) target = $region13
  $region12: #{jvp__.8} parent=0 // pred_region
    _
  $region13: #{jvp__.8} parent=0 // pred_fallthru
    _
  %v15 = vld [vmem:[%s0] sm:$0xff]
  %v16 = vld [vmem:[%s0 + $0x8] sm:$0xff]
  %v17 = vpack.c.bf16 %v16, %v15
  %v18 = vld [vmem:[%s1] sm:$0xff]
  %v19 = vpack.c.bf16 %v18, %v18
  %v20 = vld [vmem:[%s2] sm:$0x1]
  %v22 = vperm.slane %v20, 0
  %vm24 = vcmask 64512
  %v26 = vsel %vm24, %v17, 0
  %vm28 = vcmask 1043456
  %v30 = vsel %vm28, %v19, 0
  %32 = vmatpush.bf16.msra.mxu0 0
  %33 = vmatpush.bf16.msra.mxu0 0
  %34 = vmatpush.bf16.msra.mxu0 0
  %35 = vmatpush.bf16.msra.mxu0 0
  %36 = vmatpush.bf16.msra.mxu0 0
  %37 = vmatpush.bf16.msra.mxu0 0
  %38 = vmatpush.bf16.msra.mxu0 0
  %39 = vmatpush.bf16.msra.mxu0 %v30
  %40 = vmatmul.bf16.gmra.mxu0 %v26
  %v41 = vpop.f32.mrf.mxu0
  %v42 = vadd.f32 %v22, %v41
  %v43 = vpop.f32.mrf.mxu0
  %v44 = vadd.f32 %v22, %v43
  %45 = vdwg.mxu0
  %vm46 = vcmask 261120
  %47 = vst.msk [vmem:[%s3] sm:$0xff] %vm46, %v42
  %48 = vst.msk [vmem:[%s3 + $0x8] sm:$0xff] %vm46, %v44
  // Predicated region
  $region14: #{jvp__.8} parent=0 // pred_check
    _
  $region15: #{jvp__.8} parent=0 // pred_check_branch
    %50 = sbr.rel (0) target = $region17
  $region16: #{jvp__.8} parent=0 // pred_region
    _
  $region17: #{jvp__.8} parent=0 // pred_fallthru
    _
  // Predicated region
  $region18: #{jvp__.8} parent=0 // pred_check
    _
  $region19: #{jvp__.8} parent=0 // pred_check_branch
    %52 = sbr.rel (0) target = $region21
  $region20: #{jvp__.8} parent=0 // pred_region
    _
  $region21: #{jvp__.8} parent=0 // pred_fallthru
    _

// kernel: jvp__.9
$region0: #{jvp__.9}
  #allocation0 [shape = 'u32[]', space=smem, size = 0x4, offset = 0x4, fixed_abs, tag = 'smem constant byte address 0x4 - core index']
  #allocation1 [shape = 'u32[72,128]{1,0:T(1,128)}', space=vmem, size = 0x9000, scoped, tag = 'internal scratch']
  %s0 = inlined_call_operand.vmem [shape: bf16[48,59], index: 0, kind: input, shape index: {}]
  %s1 = inlined_call_operand.vmem [shape: f32[59,32], index: 1, kind: input, shape index: {}]
  %s2 = inlined_call_operand.vmem [shape: f32[1,32], index: 2, kind: input, shape index: {}]
  %s3 = inlined_call_operand.vmem [shape: f32[48,32], index: 3, kind: output, shape index: {}]
  %s4 = sld [smem:[#allocation0]]
  $region45: #{jvp__.9} parent=0
    _
  %s6 = ssub.s32 1, %s4
  %s7 = scalar_select 0, %s6, %s4
  loop: start=0, step=1, limit=5
  $region2: #{jvp__.9} parent=0 // loop_pre_header
    _
  $region3: #{jvp__.9} parent=0 // loop_header
    %s9 = sphi 0, %s13
    %p10 = scmp.ge.s32.totalorder %s9, 5
    %s19 = sphi 0, %s21
    %s22 = sphi 0, %s19
    %s23 = sphi 0, %s22
    %s39 = sphi 0, %s23
    %s43 = sphi 0, %s43
    %s45 = sphi 0, %s43
    %s46 = sphi 0, %s45
    %s60 = sphi 0, %s46
    %s64 = sphi 0, %s64
    %s66 = sphi 0, %s64
    %s67 = sphi 0, %s66
    %s81 = sphi 0, %s67
    %s87 = sphi 0, %s89
    %s90 = sphi 0, %s87
    %s91 = sphi 0, %s90
    %s107 = sphi 0, %s91
  $region4: #{jvp__.9} parent=0 // loop_header_branch
    %12 = sbr.rel (%p10) target = $region8
  $region5: #{jvp__.9} parent=0 // loop_body
    %s14 = ssub.s32 %s9, 1
    %s15 = ssub.s32 %s9, 2
    %s16 = sadd.s32 %s9, 1
    %s17 = ssub.s32 %s9, %s16
    %p18 = scmp.eq.s32.totalorder %s17, 0
    %s20 = sadd.s32 %s19, 1
    %s21 = scalar_select %p18, %s19, %s20
    %p24 = pneg %p18
    %p25 = scmp.eq.s32.totalorder %s9, 2
    %p26 = por %p24, %p25
    %p27 = scmp.ne.s32.totalorder %s19, %s22
    %p28 = scmp.eq.s32.totalorder %s9, 0
    %p29 = por %p27, %p28
    %p30 = scmp.ne.s32.totalorder %s19, %s22
    %p31 = scmp.eq.s32.totalorder %s14, 2
    %p32 = por %p30, %p31
    %p33 = scmp.ne.s32.totalorder %s22, %s23
    %p34 = scmp.eq.s32.totalorder %s14, 0
    %p35 = por %p33, %p34
    %p36 = scmp.ne.s32.totalorder %s22, %s23
    %p37 = scmp.eq.s32.totalorder %s15, 2
    %p38 = por %p36, %p37
    %p40 = scmp.ne.s32.totalorder %s23, %s39
    %p41 = scmp.eq.s32.totalorder %s15, 0
    %p42 = por %p40, %p41
    %s44 = sadd.s32 %s43, 1
    %p47 = scmp.eq.s32.totalorder %s9, 2
    %p48 = scmp.ne.s32.totalorder %s43, %s45
    %p49 = scmp.eq.s32.totalorder %s9, 0
    %p50 = por %p48, %p49
    %p51 = scmp.ne.s32.totalorder %s43, %s45
    %p52 = scmp.eq.s32.totalorder %s14, 2
    %p53 = por %p51, %p52
    %p54 = scmp.ne.s32.totalorder %s45, %s46
    %p55 = scmp.eq.s32.totalorder %s14, 0
    %p56 = por %p54, %p55
    %p57 = scmp.ne.s32.totalorder %s45, %s46
    %p58 = scmp.eq.s32.totalorder %s15, 2
    %p59 = por %p57, %p58
    %p61 = scmp.ne.s32.totalorder %s46, %s60
    %p62 = scmp.eq.s32.totalorder %s15, 0
    %p63 = por %p61, %p62
    %s65 = sadd.s32 %s64, 1
    %p68 = scmp.eq.s32.totalorder %s9, 2
    %p69 = scmp.ne.s32.totalorder %s64, %s66
    %p70 = scmp.eq.s32.totalorder %s9, 0
    %p71 = por %p69, %p70
    %p72 = scmp.ne.s32.totalorder %s64, %s66
    %p73 = scmp.eq.s32.totalorder %s14, 2
    %p74 = por %p72, %p73
    %p75 = scmp.ne.s32.totalorder %s66, %s67
    %p76 = scmp.eq.s32.totalorder %s14, 0
    %p77 = por %p75, %p76
    %p78 = scmp.ne.s32.totalorder %s66, %s67
    %p79 = scmp.eq.s32.totalorder %s15, 2
    %p80 = por %p78, %p79
    %p82 = scmp.ne.s32.totalorder %s67, %s81
    %p83 = scmp.eq.s32.totalorder %s15, 0
    %p84 = por %p82, %p83
    %s85 = ssub.s32 %s9, %s16
    %p86 = scmp.eq.s32.totalorder %s85, 0
    %s88 = sadd.s32 %s87, 1
    %s89 = scalar_select %p86, %s87, %s88
    %p92 = pneg %p86
    %p93 = scmp.eq.s32.totalorder %s9, 2
    %p94 = por %p92, %p93
    %p95 = scmp.ne.s32.totalorder %s87, %s90
    %p96 = scmp.eq.s32.totalorder %s9, 0
    %p97 = por %p95, %p96
    %p98 = scmp.ne.s32.totalorder %s87, %s90
    %p99 = scmp.eq.s32.totalorder %s14, 2
    %p100 = por %p98, %p99
    %p101 = scmp.ne.s32.totalorder %s90, %s91
    %p102 = scmp.eq.s32.totalorder %s14, 0
    %p103 = por %p101, %p102
    %p104 = scmp.ne.s32.totalorder %s90, %s91
    %p105 = scmp.eq.s32.totalorder %s15, 2
    %p106 = por %p104, %p105
    %p108 = scmp.ne.s32.totalorder %s91, %s107
    %p109 = scmp.eq.s32.totalorder %s15, 0
    %p110 = por %p108, %p109
    %p111 = scmp.le.s32.totalorder 1, %s9
    %p112 = scmp.lt.s32.totalorder %s9, 4
    %p113 = pnand %p111, %p112
    %p114 = pneg %p113
    // Predicated region
    $region9: #{jvp__.9} parent=5 // pred_check
      _
    $region10: #{jvp__.9} parent=5 // pred_check_branch
      %116 = sbr.rel (%p113) target = $region12
    $region11: #{jvp__.9} parent=5 // pred_region
      %s117 = ssub.s32 %s9, 1
      // Predicated region
      $region13: #{jvp__.9} parent=11 // pred_check
        %p118 = pneg %p56
      $region14: #{jvp__.9} parent=11 // pred_check_branch
        %120 = sbr.rel (%p118) target = $region16
      $region15: #{jvp__.9} parent=11 // pred_region
        _
      $region16: #{jvp__.9} parent=11 // pred_fallthru
        _
      // Predicated region
      $region17: #{jvp__.9} parent=11 // pred_check
        %p121 = pneg %p77
      $region18: #{jvp__.9} parent=11 // pred_check_branch
        %123 = sbr.rel (%p121) target = $region20
      $region19: #{jvp__.9} parent=11 // pred_region
        _
      $region20: #{jvp__.9} parent=11 // pred_fallthru
        _
    $region12: #{jvp__.9} parent=5 // pred_fallthru
      _
    %p124 = scmp.lt.s32.totalorder %s9, 3
    // Predicated region
    $region21: #{jvp__.9} parent=5 // pred_check
      %p125 = pneg %p124
    $region22: #{jvp__.9} parent=5 // pred_check_branch
      %127 = sbr.rel (%p125) target = $region24
    $region23: #{jvp__.9} parent=5 // pred_region
      // Predicated region
      $region25: #{jvp__.9} parent=23 // pred_check
        %p128 = pneg %p29
      $region26: #{jvp__.9} parent=23 // pred_check_branch
        %130 = sbr.rel (%p128) target = $region28
      $region27: #{jvp__.9} parent=23 // pred_region
        %s131 = smul.u32 2, %s9
        %p132 = scmp.lt.s32.totalorder %s131, 5
        %s133 = scalar_select %p132, %s131, 5
        %s134 = smul.addr %s133, 4
        %s135 = scalar_lea.vmem %s0, %s134
        %s136 = smul.u32 2, %s9
      $region28: #{jvp__.9} parent=23 // pred_fallthru
        _
    $region24: #{jvp__.9} parent=5 // pred_fallthru
      _
    %p137 = scmp.le.s32.totalorder 1, %s9
    %p138 = scmp.lt.s32.totalorder %s9, 4
    %p139 = pnand %p137, %p138
    %p140 = pneg %p139
    // Predicated region
    $region29: #{jvp__.9} parent=5 // pred_check
      _
    $region30: #{jvp__.9} parent=5 // pred_check_branch
      %142 = sbr.rel (%p139) target = $region32
    $region31: #{jvp__.9} parent=5 // pred_region
      %s143 = ssub.s32 %s9, 1
      %s144 = smul.u32 2, %s14
      %p145 = scmp.lt.s32.totalorder %s144, 5
      %s146 = scalar_select %p145, %s144, 5
      %s147 = smul.addr %s146, 4
      %s148 = scalar_lea.vmem %s0, %s147
      %p149 = pneg %p35
      %p150 = pneg %p32
      %p151 = pneg %p56
      %p152 = pneg %p53
      %p153 = pneg %p77
      %p154 = pneg %p74
      %p155 = pneg %p103
      %p156 = pneg %p100
      %s157 = smul.u32 2, %s14
      %p158 = scmp.lt.s32.totalorder %s157, 5
      %s159 = scalar_select %p158, %s157, 5
      %s160 = smul.addr %s159, 8
      %s161 = scalar_lea.vmem %s3, %s160
      %s162 = smul.u32 2, %s14
      %p163 = scmp.lt.s32.totalorder %s162, 5
      %s164 = scalar_select %p163, %s162, 5
      %s165 = smul.addr %s164, 4
      %s166 = scalar_lea.vmem %s0, %s165
      %s167 = smul.u32 2, %s14
      %s168 = smul.u32 2, %s14
      %p169 = scmp.lt.s32.totalorder %s168, 5
      %s170 = scalar_select %p169, %s168, 5
      %s171 = smul.addr %s170, 8
      %s172 = scalar_lea.vmem %s3, %s171
      %s173 = smul.u32 2, %s14
      %v175 = vld [vmem:[%s1] sm:$0xff]
      %v176 = vld [vmem:[%s1 + $0x8] sm:$0xff]
      %v177 = vld [vmem:[%s1 + $0x10] sm:$0xff]
      %v178 = vld [vmem:[%s1 + $0x18] sm:$0xff]
      %v179 = vld [vmem:[%s1 + $0x20] sm:$0xff]
      %v180 = vld [vmem:[%s1 + $0x28] sm:$0xff]
      %v181 = vld [vmem:[%s1 + $0x30] sm:$0xff]
      %v182 = vld [vmem:[%s1 + $0x38] sm:$0x7]
      %v183 = vpack.c.bf16 %v176, %v175
      %v184 = vpack.c.bf16 %v178, %v177
      %v185 = vpack.c.bf16 %v180, %v179
      %v186 = vpack.c.bf16 %v182, %v181
      %v187 = vld [vmem:[%s166] sm:$0xf]
      %v188 = vld [vmem:[%s166 + $0x4] sm:$0xf]
      %v189 = vld [vmem:[%s2] sm:$0x1]
      %v191 = vperm.slane %v189, 0
      %v195 = vunpack.c.l.b16 %v187
      %v196 = vunpack.c.l.b16 %v188
      %v197 = vpack.c.b16 %v196, %v195
      %vm198 = vcmask 482304
      %v200 = vsel %vm198, %v197, 0
      %vm202 = vcmask 1044480
      %vm203 = vcmask 1045504
      %v204 = vsel %vm202, 4294967295, 65535
      %v205 = vsel %vm203, %v204, 0
      %v207 = vand.u32 %v186, %v205
      %209 = vmatpush.bf16.msra.mxu0 0
      %210 = vmatpush.bf16.msra.mxu0 0
      %211 = vmatpush.bf16.msra.mxu0 0
      %212 = vmatpush.bf16.msra.mxu0 0
      %213 = vmatpush.bf16.msra.mxu0 %v207
      %214 = vmatpush.bf16.msra.mxu0 %v185
      %215 = vmatpush.bf16.msra.mxu0 %v184
      %216 = vmatpush.bf16.msra.mxu0 %v183
      %217 = vmatmul.bf16.gmra.mxu0 %v200
      %v218 = vpop.f32.mrf.mxu0
      %v219 = vadd.f32 %v191, %v218
      %v220 = vpop.f32.mrf.mxu0
      %v221 = vadd.f32 %v191, %v220
      %222 = vdwg.mxu0
      %v223 = vsub.f32 0.0, %v219
      %v224 = vsub.f32 0.0, %v221
      %v225 = vmul.f32 %v223, 1.442695
      %v226 = vpow.pop %v225
      %v227 = vmul.f32 %v224, 1.442695
      %v228 = vpow.pop %v227
      %v229 = vadd.f32 %v226, 1.0
      %v230 = vadd.f32 %v228, 1.0
      %v231 = vrcp.pop %v229
      %v232 = vrcp.pop %v230
      %v233 = vmul.f32 %v219, %v231
      %v234 = vmul.f32 %v221, %v232
      %vm235 = vcmask 261120
      %236 = vst.msk [vmem:[%s172] sm:$0xff] %vm235, %v233
      %237 = vst.msk [vmem:[%s172 + $0x8] sm:$0xff] %vm235, %v234
      %s238 = smul.u32 2, %s14
      %p239 = scmp.lt.s32.totalorder %s238, 5
      %s240 = scalar_select %p239, %s238, 5
      %s241 = smul.addr %s240, 8
      %s242 = scalar_lea.vmem %s3, %s241
      // Predicated region
      $region33: #{jvp__.9} parent=31 // pred_check
        %p243 = pneg %p100
      $region34: #{jvp__.9} parent=31 // pred_check_branch
        %245 = sbr.rel (%p243) target = $region36
      $region35: #{jvp__.9} parent=31 // pred_region
        %s246 = smul.u32 2, %s14
      $region36: #{jvp__.9} parent=31 // pred_fallthru
        _
    $region32: #{jvp__.9} parent=5 // pred_fallthru
      _
    %p247 = scmp.le.s32.totalorder 2, %s9
    // Predicated region
    $region37: #{jvp__.9} parent=5 // pred_check
      %p248 = pneg %p247
    $region38: #{jvp__.9} parent=5 // pred_check_branch
      %250 = sbr.rel (%p248) target = $region40
    $region39: #{jvp__.9} parent=5 // pred_region
      %s251 = ssub.s32 %s9, 2
      // Predicated region
      $region41: #{jvp__.9} parent=39 // pred_check
        %p252 = pneg %p106
      $region42: #{jvp__.9} parent=39 // pred_check_branch
        %254 = sbr.rel (%p252) target = $region44
      $region43: #{jvp__.9} parent=39 // pred_region
        %s255 = smul.u32 2, %s15
        %p256 = scmp.lt.s32.totalorder %s255, 5
        %s257 = scalar_select %p256, %s255, 5
        %s258 = smul.addr %s257, 8
        %s259 = scalar_lea.vmem %s3, %s258
      $region44: #{jvp__.9} parent=39 // pred_fallthru
        _
    $region40: #{jvp__.9} parent=5 // pred_fallthru
      _
  $region6: #{jvp__.9} parent=0 // loop_footer
    %s13 = sadd.s32 1, %s9
  $region7: #{jvp__.9} parent=0 // loop_footer_branch
    %8 = sbr.rel target = $region3
  $region8: #{jvp__.9} parent=0 // loop_exit
    _

// kernel: jvp__.10
$region0: #{jvp__.10}
  #allocation0 [shape = 'u32[]', space=smem, size = 0x4, offset = 0x4, fixed_abs, tag = 'smem constant byte address 0x4 - core index']
  #allocation1 [shape = 'u32[72,128]{1,0:T(1,128)}', space=vmem, size = 0x9000, scoped, tag = 'internal scratch']
  %s0 = inlined_call_operand.vmem [shape: bf16[16,64], index: 0, kind: input, shape index: {}]
  %s1 = inlined_call_operand.vmem [shape: f32[64,32], index: 1, kind: input, shape index: {}]
  %s2 = inlined_call_operand.vmem [shape: f32[1,32], index: 2, kind: input, shape index: {}]
  %s3 = inlined_call_operand.vmem [shape: f32[16,32], index: 3, kind: output, shape index: {}]
  %s4 = sld [smem:[#allocation0]]
  $region22: #{jvp__.10} parent=0
    _
  %s6 = ssub.s32 1, %s4
  %s7 = scalar_select 0, %s6, %s4
  // Predicated region
  $region2: #{jvp__.10} parent=0 // pred_check
    _
  $region3: #{jvp__.10} parent=0 // pred_check_branch
    %9 = sbr.rel (0) target = $region5
  $region4: #{jvp__.10} parent=0 // pred_region
    _
  $region5: #{jvp__.10} parent=0 // pred_fallthru
    _
  // Predicated region
  $region6: #{jvp__.10} parent=0 // pred_check
    _
  $region7: #{jvp__.10} parent=0 // pred_check_branch
    %11 = sbr.rel (0) target = $region9
  $region8: #{jvp__.10} parent=0 // pred_region
    _
  $region9: #{jvp__.10} parent=0 // pred_fallthru
    _
  // Predicated region
  $region10: #{jvp__.10} parent=0 // pred_check
    _
  $region11: #{jvp__.10} parent=0 // pred_check_branch
    %13 = sbr.rel (0) target = $region13
  $region12: #{jvp__.10} parent=0 // pred_region
    _
  $region13: #{jvp__.10} parent=0 // pred_fallthru
    _
  %v15 = vld [vmem:[%s1] sm:$0xff]
  %v16 = vld [vmem:[%s1 + $0x8] sm:$0xff]
  %v17 = vld [vmem:[%s1 + $0x10] sm:$0xff]
  %v18 = vld [vmem:[%s1 + $0x18] sm:$0xff]
  %v19 = vld [vmem:[%s1 + $0x20] sm:$0xff]
  %v20 = vld [vmem:[%s1 + $0x28] sm:$0xff]
  %v21 = vld [vmem:[%s1 + $0x30] sm:$0xff]
  %v22 = vld [vmem:[%s1 + $0x38] sm:$0xff]
  %v23 = vpack.c.bf16 %v16, %v15
  %v24 = vpack.c.bf16 %v18, %v17
  %v25 = vpack.c.bf16 %v20, %v19
  %v26 = vpack.c.bf16 %v22, %v21
  %v27 = vld [vmem:[%s0] sm:$0xf]
  %v28 = vld [vmem:[%s0 + $0x4] sm:$0xf]
  %v29 = vld [vmem:[%s2] sm:$0x1]
  %v31 = vperm.slane %v29, 0
  %v35 = vunpack.c.l.b16 %v27
  %v36 = vunpack.c.l.b16 %v28
  %v37 = vpack.c.b16 %v36, %v35
  %vm38 = vcmask 523264
  %v40 = vsel %vm38, %v37, 0
  %42 = vmatpush.bf16.msra.mxu0 0
  %43 = vmatpush.bf16.msra.mxu0 0
  %44 = vmatpush.bf16.msra.mxu0 0
  %45 = vmatpush.bf16.msra.mxu0 0
  %46 = vmatpush.bf16.msra.mxu0 %v26
  %47 = vmatpush.bf16.msra.mxu0 %v25
  %48 = vmatpush.bf16.msra.mxu0 %v24
  %49 = vmatpush.bf16.msra.mxu0 %v23
  %50 = vmatmul.bf16.gmra.mxu0 %v40
  %v51 = vpop.f32.mrf.mxu0
  %v52 = vadd.f32 %v31, %v51
  %v53 = vpop.f32.mrf.mxu0
  %v54 = vadd.f32 %v31, %v53
  %55 = vdwg.mxu0
  %v56 = vsub.f32 0.0, %v52
  %v57 = vsub.f32 0.0, %v54
  %v58 = vmul.f32 %v56, 1.442695
  %v59 = vpow.pop %v58
  %v60 = vmul.f32 %v57, 1.442695
  %v61 = vpow.pop %v60
  %v62 = vadd.f32 %v59, 1.0
  %v63 = vadd.f32 %v61, 1.0
  %v64 = vrcp.pop %v62
  %v65 = vrcp.pop %v63
  %v66 = vmul.f32 %v52, %v64
  %v67 = vmul.f32 %v54, %v65
  %vm68 = vcmask 261120
  %69 = vst.msk [vmem:[%s3] sm:$0xff] %vm68, %v66
  %70 = vst.msk [vmem:[%s3 + $0x8] sm:$0xff] %vm68, %v67
  // Predicated region
  $region14: #{jvp__.10} parent=0 // pred_check
    _
  $region15: #{jvp__.10} parent=0 // pred_check_branch
    %72 = sbr.rel (0) target = $region17
  $region16: #{jvp__.10} parent=0 // pred_region
    _
  $region17: #{jvp__.10} parent=0 // pred_fallthru
    _
  // Predicated region
  $region18: #{jvp__.10} parent=0 // pred_check
    _
  $region19: #{jvp__.10} parent=0 // pred_check_branch
    %74 = sbr.rel (0) target = $region21
  $region20: #{jvp__.10} parent=0 // pred_region
    _
  $region21: #{jvp__.10} parent=0 // pred_fallthru
    _

// kernel: jvp__.15
$region0: #{jvp__.15}
  #allocation0 [shape = 'u32[]', space=smem, size = 0x4, offset = 0x4, fixed_abs, tag = 'smem constant byte address 0x4 - core index']
  #allocation1 [shape = 'u32[72,128]{1,0:T(1,128)}', space=vmem, size = 0x9000, scoped, tag = 'internal scratch']
  %s0 = inlined_call_operand.vmem [shape: bf16[16,32], index: 0, kind: input, shape index: {}]
  %s1 = inlined_call_operand.vmem [shape: f32[32,16], index: 1, kind: input, shape index: {}]
  %s2 = inlined_call_operand.vmem [shape: f32[1,16], index: 2, kind: input, shape index: {}]
  %s3 = inlined_call_operand.vmem [shape: f32[16,3], index: 3, kind: input, shape index: {}]
  %s4 = inlined_call_operand.vmem [shape: f32[1,3], index: 4, kind: input, shape index: {}]
  %s5 = inlined_call_operand.vmem [shape: f32[16,3], index: 5, kind: output, shape index: {}]
  %s6 = sld [smem:[#allocation0]]
  $region30: #{jvp__.15} parent=0
    _
  %s8 = ssub.s32 1, %s6
  %s9 = scalar_select 0, %s8, %s6
  // Predicated region
  $region2: #{jvp__.15} parent=0 // pred_check
    _
  $region3: #{jvp__.15} parent=0 // pred_check_branch
    %11 = sbr.rel (0) target = $region5
  $region4: #{jvp__.15} parent=0 // pred_region
    _
  $region5: #{jvp__.15} parent=0 // pred_fallthru
    _
  // Predicated region
  $region6: #{jvp__.15} parent=0 // pred_check
    _
  $region7: #{jvp__.15} parent=0 // pred_check_branch
    %13 = sbr.rel (0) target = $region9
  $region8: #{jvp__.15} parent=0 // pred_region
    _
  $region9: #{jvp__.15} parent=0 // pred_fallthru
    _
  // Predicated region
  $region10: #{jvp__.15} parent=0 // pred_check
    _
  $region11: #{jvp__.15} parent=0 // pred_check_branch
    %15 = sbr.rel (0) target = $region13
  $region12: #{jvp__.15} parent=0 // pred_region
    _
  $region13: #{jvp__.15} parent=0 // pred_fallthru
    _
  // Predicated region
  $region14: #{jvp__.15} parent=0 // pred_check
    _
  $region15: #{jvp__.15} parent=0 // pred_check_branch
    %17 = sbr.rel (0) target = $region17
  $region16: #{jvp__.15} parent=0 // pred_region
    _
  $region17: #{jvp__.15} parent=0 // pred_fallthru
    _
  // Predicated region
  $region18: #{jvp__.15} parent=0 // pred_check
    _
  $region19: #{jvp__.15} parent=0 // pred_check_branch
    %19 = sbr.rel (0) target = $region21
  $region20: #{jvp__.15} parent=0 // pred_region
    _
  $region21: #{jvp__.15} parent=0 // pred_fallthru
    _
  %v21 = vld [vmem:[%s1] sm:$0xff]
  %v22 = vld [vmem:[%s1 + $0x8] sm:$0xff]
  %v23 = vld [vmem:[%s1 + $0x10] sm:$0xff]
  %v24 = vld [vmem:[%s1 + $0x18] sm:$0xff]
  %v25 = vpack.c.bf16 %v22, %v21
  %v26 = vpack.c.bf16 %v24, %v23
  %v27 = vld [vmem:[%s3] sm:$0xff]
  %v28 = vld [vmem:[%s3 + $0x8] sm:$0xff]
  %v29 = vpack.c.bf16 %v28, %v27
  %v30 = vld [vmem:[%s0] sm:$0xf]
  %v31 = vld [vmem:[%s0 + $0x4] sm:$0xf]
  %v32 = vld [vmem:[%s2] sm:$0x1]
  %v34 = vperm.slane %v32, 0
  %v38 = vunpack.c.l.b16 %v30
  %v39 = vunpack.c.l.b16 %v31
  %v40 = vpack.c.b16 %v39, %v38
  %vm41 = vcmask 261120
  %v43 = vsel %vm41, %v40, 0
  %45 = vmatpush.bf16.msra.mxu0 0
  %46 = vmatpush.bf16.msra.mxu0 0
  %47 = vmatpush.bf16.msra.mxu0 0
  %48 = vmatpush.bf16.msra.mxu0 0
  %49 = vmatpush.bf16.msra.mxu0 0
  %50 = vmatpush.bf16.msra.mxu0 0
  %51 = vmatpush.bf16.msra.mxu0 %v26
  %52 = vmatpush.bf16.msra.mxu0 %v25
  %53 = vmatmul.bf16.gmra.mxu0 %v43
  %v54 = vpop.f32.mrf.mxu0
  %v55 = vadd.f32 %v34, %v54
  %v56 = vpop.f32.mrf.mxu0
  %v57 = vadd.f32 %v34, %v56
  %58 = vdwg.mxu0
  %v59 = vsub.f32 0.0, %v55
  %v60 = vsub.f32 0.0, %v57
  %v61 = vmul.f32 %v59, 1.442695
  %v62 = vpow.pop %v61
  %v63 = vmul.f32 %v60, 1.442695
  %v64 = vpow.pop %v63
  %v65 = vadd.f32 %v62, 1.0
  %v66 = vadd.f32 %v64, 1.0
  %v67 = vrcp.pop %v65
  %v68 = vrcp.pop %v66
  %v69 = vmul.f32 %v55, %v67
  %v70 = vmul.f32 %v57, %v68
  %v71 = vpack.c.bf16 %v70, %v69
  %v72 = vld [vmem:[%s4] sm:$0x1]
  %v74 = vperm.slane %v72, 0
  %vm76 = vcmask 130048
  %v78 = vsel %vm76, %v71, 0
  %80 = vmatpush.bf16.msra.mxu0 0
  %81 = vmatpush.bf16.msra.mxu0 0
  %82 = vmatpush.bf16.msra.mxu0 0
  %83 = vmatpush.bf16.msra.mxu0 0
  %84 = vmatpush.bf16.msra.mxu0 0
  %85 = vmatpush.bf16.msra.mxu0 0
  %86 = vmatpush.bf16.msra.mxu0 0
  %87 = vmatpush.bf16.msra.mxu0 %v29
  %88 = vmatmul.bf16.gmra.mxu0 %v78
  %v89 = vpop.f32.mrf.mxu0
  %v90 = vadd.f32 %v74, %v89
  %v91 = vpop.f32.mrf.mxu0
  %v92 = vadd.f32 %v74, %v91
  %93 = vdwg.mxu0
  %vm94 = vcmask 23552
  %95 = vst.msk [vmem:[%s5] sm:$0xff] %vm94, %v90
  %96 = vst.msk [vmem:[%s5 + $0x8] sm:$0xff] %vm94, %v92
  // Predicated region
  $region22: #{jvp__.15} parent=0 // pred_check
    _
  $region23: #{jvp__.15} parent=0 // pred_check_branch
    %98 = sbr.rel (0) target = $region25
  $region24: #{jvp__.15} parent=0 // pred_region
    _
  $region25: #{jvp__.15} parent=0 // pred_fallthru
    _
  // Predicated region
  $region26: #{jvp__.15} parent=0 // pred_check
    _
  $region27: #{jvp__.15} parent=0 // pred_check_branch
    %100 = sbr.rel (0) target = $region29
  $region28: #{jvp__.15} parent=0 // pred_region
    _
  $region29: #{jvp__.15} parent=0 // pred_fallthru
    _

// kernel: split.1
$region0: #{split.1}
  #allocation0 [shape = 'u32[2048]{0}', space=vmem, size = 0x2000, scoped, tag = 'scoped memory for split.1']
  #allocation1 [shape = 'u32[2048]{0}', space=vmem, size = 0x2000, scoped, tag = 'scoped memory for split.1']
  #allocation2 [shape = 'u32[2048]{0}', space=vmem, size = 0x2000, scoped, tag = 'scoped memory for split.1']
  #allocation3 [shape = 'u32[2048]{0}', space=vmem, size = 0x2000, scoped, tag = 'scoped memory for split.1']
  #allocation4 [shape = 'u32[2048]{0}', space=vmem, size = 0x2000, scoped, tag = 'scoped memory for split.1']
  #allocation5 [shape = 's32[1]{0}', space=sflag, size = 0x4, scoped, tag = 'scoped memory for split.1']
  %s0 = inlined_call_operand.vmem [shape: bf16[16,64], index: 0, kind: input, shape index: {}]
  %s1 = inlined_call_operand.vmem [shape: f32[16,32], index: 1, kind: output, shape index: {}]
  %v2 = vld [vmem:[%s0] sm:$0xf]
  %v3 = vunpack.c.l.bf16 %v2
  %v4 = vunpack.c.h.bf16 %v2
  %v5 = vlaneseq
  %v6 = vand.u32 %v5, 127
  %vm7 = vcmp.lt.s32.totalorder %v6, 32
  %v8 = vsel %vm7, 0, %v3
  %9 = vrot.lane.b32.xlu0 %v8, 96
  %v10 = vpop.permute.xlu0 %9
  %11 = vst [vmem:[%s1] sm:$0xff] %v10
  %s12 = scalar_lea.vmem %s0, 4
  %v13 = vld [vmem:[%s12] sm:$0xf]
  %v14 = vunpack.c.l.bf16 %v13
  %v15 = vunpack.c.h.bf16 %v13
  %v16 = vlaneseq
  %v17 = vand.u32 %v16, 127
  %vm18 = vcmp.lt.s32.totalorder %v17, 32
  %v19 = vsel %vm18, 0, %v14
  %20 = vrot.lane.b32.xlu0 %v19, 96
  %v21 = vpop.permute.xlu0 %20
  %s22 = scalar_lea.vmem %s1, 8
  %23 = vst [vmem:[%s22] sm:$0xff] %v21

</llo_original>
